<compile_context>
chip_gen: v7x
topology: tpu7x:2x2x1
jax: 0.10.0
libtpu: 0.0.40
codegen_flags: <defaults>
</compile_context>

<pallas_src>
import jax
import jax.numpy as jnp
from jax.experimental import pallas as pl
from jax.experimental.pallas import tpu as pltpu

FC1_UNITS = 256
FC2_UNITS = 128
OUT_PAD = 128          # lane-dense padded width of the fc3 output (true width = 1)
BN_EPS = 1e-5


def critic_kernel(s_ref, a_ref,
                  w1s_ref, w1a_ref, b1_ref,
                  w2_ref, b2_ref,
                  w3_ref, b3_ref,
                  gamma_ref, beta_ref,
                  out_ref):
    # Activations cast to bf16 only for the MXU pushes; accumulation is f32.
    s = s_ref[...].astype(jnp.bfloat16)                       # [B, Ds]
    a = a_ref[...].astype(jnp.bfloat16)                       # [B, Da]

    # ---- fc1 on cat(states, actions) as a split matmul + relu ----
    h1 = jnp.dot(s, w1s_ref[...], preferred_element_type=jnp.float32)
    h1 = h1 + jnp.dot(a, w1a_ref[...], preferred_element_type=jnp.float32)
    h1 = jnp.maximum(h1 + b1_ref[...], 0.0)                   # [B, 256] f32

    # ---- BatchNorm1d (training mode), fused scale/shift, one-pass variance ----
    inv_n = 1.0 / h1.shape[0]
    mean = jnp.sum(h1, axis=0, keepdims=True) * inv_n         # [1, 256]
    mean_sq = jnp.sum(h1 * h1, axis=0, keepdims=True) * inv_n
    var = mean_sq - mean * mean
    inv_std = jax.lax.rsqrt(var + BN_EPS)
    scale = gamma_ref[...] * inv_std                          # [1, 256]
    shift = beta_ref[...] - mean * scale
    y = h1 * scale + shift                                    # [B, 256] f32

    # ---- fc2 + relu ----
    h2 = jnp.dot(y.astype(jnp.bfloat16), w2_ref[...],
                 preferred_element_type=jnp.float32)
    h2 = jnp.maximum(h2 + b2_ref[...], 0.0)                   # [B, 128] f32

    # ---- fc3 (linear Q head), padded to 128 lanes for a dense store ----
    q = jnp.dot(h2.astype(jnp.bfloat16), w3_ref[...],
                preferred_element_type=jnp.float32)
    out_ref[...] = (q + b3_ref[...]).astype(out_ref.dtype)    # [B, 128]


def _critic_forward_impl(states, actions, kp):
    """states: [B, Ds] f32, actions: [B, Da] f32 -> Q-values [B, 1] f32."""
    B, Ds = states.shape
    Da = actions.shape[1]

    operands = (states, actions,
                kp["w1s"], kp["w1a"], kp["b1"],
                kp["w2"], kp["b2"],
                kp["w3_pad"], kp["b3_pad"],
                kp["gamma"], kp["beta"])

    flops = 2 * B * ((Ds + Da) * FC1_UNITS + FC1_UNITS * FC2_UNITS
                     + FC2_UNITS * OUT_PAD)
    # Bytes: exactly the 11 kernel operands + the padded output tile.
    bytes_accessed = (sum(int(x.size) * x.dtype.itemsize for x in operands)
                      + B * OUT_PAD * 4)
    cost = pl.CostEstimate(flops=flops, transcendentals=FC1_UNITS,
                           bytes_accessed=bytes_accessed)

    vmem = pl.BlockSpec(memory_space=pltpu.MemorySpace.VMEM)
    out_padded = pl.pallas_call(
        critic_kernel,
        out_shape=jax.ShapeDtypeStruct((B, OUT_PAD), jnp.float32),
        in_specs=[vmem] * len(operands),
        out_specs=vmem,
        cost_estimate=cost,
    )(*operands)
    return out_padded[:, :1]


# Single compiled dispatch: pallas_call + the slice fuse under one jit.
critic_forward = jax.jit(_critic_forward_impl)


def init_critic_params(key, state_size, action_size,
                       fc1_units=FC1_UNITS, fc2_units=FC2_UNITS):
    """Deterministic synthetic init mirroring the PyTorch Critic's shapes/ranges."""
    ks = jax.random.split(key, 6)
    input_size = state_size + action_size

    # hidden_init() in the reference uses weight.size()[0] == out_features.
    lim1 = 1.0 / jnp.sqrt(jnp.float32(fc1_units))
    lim2 = 1.0 / jnp.sqrt(jnp.float32(fc2_units))

    # Weights stored transposed: [in, out]. fc1's weight is split along its
    # input dim into a states part and an actions part (concat folded away).
    w1 = jax.random.uniform(ks[0], (input_size, fc1_units), jnp.float32, -lim1, lim1)
    w2 = jax.random.uniform(ks[1], (fc1_units, fc2_units), jnp.float32, -lim2, lim2)
    w3 = jax.random.uniform(ks[2], (fc2_units, 1), jnp.float32, -3e-3, 3e-3)

    # Biases keep PyTorch's default Linear init range: U(-1/sqrt(in_features), +).
    bl1 = 1.0 / jnp.sqrt(jnp.float32(input_size))
    bl2 = 1.0 / jnp.sqrt(jnp.float32(fc1_units))
    bl3 = 1.0 / jnp.sqrt(jnp.float32(fc2_units))
    b1 = jax.random.uniform(ks[3], (1, fc1_units), jnp.float32, -bl1, bl1)
    b2 = jax.random.uniform(ks[4], (1, fc2_units), jnp.float32, -bl2, bl2)
    b3 = jax.random.uniform(ks[5], (1, 1), jnp.float32, -bl3, bl3)

    # Zero-pad the fc3 head to OUT_PAD lanes (kernel writes a dense [B,128] tile).
    w3_pad = jnp.zeros((fc2_units, OUT_PAD), jnp.float32).at[:, :1].set(w3)
    b3_pad = jnp.zeros((1, OUT_PAD), jnp.float32).at[:, :1].set(b3)

    # BatchNorm1d default affine params.
    gamma = jnp.ones((1, fc1_units), jnp.float32)
    beta = jnp.zeros((1, fc1_units), jnp.float32)

    # Kernel operand set: matmul weights in bf16 (MXU-native, half the DMA),
    # biases / BN affine params stay f32 (added to f32 accumulators).
    kernel_params = {
        "w1s": w1[:state_size].astype(jnp.bfloat16),
        "w1a": w1[state_size:].astype(jnp.bfloat16),
        "b1": b1,
        "w2": w2.astype(jnp.bfloat16),
        "b2": b2,
        "w3_pad": w3_pad.astype(jnp.bfloat16),
        "b3_pad": b3_pad,
        "gamma": gamma,
        "beta": beta,
    }
    # Full-precision copies for the f32 semantic reference.
    ref_params = {
        "w1_full": w1, "b1": b1,
        "w2": w2, "b2": b2,
        "w3": w3, "b3": b3,
        "gamma": gamma, "beta": beta,
    }
    return {"kernel": kernel_params, "ref": ref_params}


def critic_reference_bf16(states, actions, kp):
    """Pure-JAX mirror of the kernel's exact (bf16-weight) computation."""
    s = states.astype(jnp.bfloat16)
    a = actions.astype(jnp.bfloat16)
    h1 = (jnp.dot(s, kp["w1s"], preferred_element_type=jnp.float32)
          + jnp.dot(a, kp["w1a"], preferred_element_type=jnp.float32))
    h1 = jnp.maximum(h1 + kp["b1"], 0.0)
    inv_n = 1.0 / h1.shape[0]
    mean = jnp.sum(h1, axis=0, keepdims=True) * inv_n
    mean_sq = jnp.sum(h1 * h1, axis=0, keepdims=True) * inv_n
    var = mean_sq - mean * mean
    inv_std = jax.lax.rsqrt(var + BN_EPS)
    scale = kp["gamma"] * inv_std
    shift = kp["beta"] - mean * scale
    y = h1 * scale + shift
    h2 = jnp.maximum(jnp.dot(y.astype(jnp.bfloat16), kp["w2"],
                             preferred_element_type=jnp.float32) + kp["b2"], 0.0)
    q = jnp.dot(h2.astype(jnp.bfloat16), kp["w3_pad"],
                preferred_element_type=jnp.float32) + kp["b3_pad"]
    return q[:, :1]


def critic_reference_f32(states, actions, p):
    """Pure-f32 JAX reference matching the original PyTorch module semantics."""
    xs = jnp.concatenate([states, actions], axis=1)
    h1 = jnp.maximum(xs @ p["w1_full"] + p["b1"], 0.0)
    mean = jnp.mean(h1, axis=0, keepdims=True)
    var = jnp.mean((h1 - mean) ** 2, axis=0, keepdims=True)
    y = (h1 - mean) / jnp.sqrt(var + BN_EPS) * p["gamma"] + p["beta"]
    h2 = jnp.maximum(y @ p["w2"] + p["b2"], 0.0)
    return h2 @ p["w3"] + p["b3"]


if __name__ == "__main__":
    key = jax.random.PRNGKey(0)
    k_param, k_s, k_a = jax.random.split(key, 3)

    batch = 8
    state_size = 24
    action_size = 4

    params = init_critic_params(k_param, state_size, action_size)
    states = jax.random.normal(k_s, (batch, state_size), jnp.float32)
    actions = jax.random.normal(k_a, (batch, action_size), jnp.float32)

    q = critic_forward(states, actions, params["kernel"])
    q = jax.block_until_ready(q)
    assert q.shape == (batch, 1)

    # Tight check: kernel vs. a pure-JAX mirror of the same bf16/f32 recipe.
    ref_bf16 = critic_reference_bf16(states, actions, params["kernel"])
    err_bf16 = float(jnp.max(jnp.abs(q - ref_bf16)))
    assert jnp.allclose(q, ref_bf16, atol=1e-4, rtol=1e-4), (
        f"bf16-mirror max abs err = {err_bf16}")

    # Semantic check: kernel vs. the full-f32 PyTorch-equivalent forward
    # (looser tolerance covers the bf16 weight/activation quantization).
    ref_f32 = critic_reference_f32(states, actions, params["ref"])
    err_f32 = float(jnp.max(jnp.abs(q - ref_f32)))
    assert jnp.allclose(q, ref_f32, atol=5e-3, rtol=5e-2), (
        f"f32-reference max abs err = {err_f32}")

    print("KERNEL_OK")
</pallas_src>

<mosaic_0001>
module attributes {stable_mosaic.version = 11 : i64} {
  func.func @critic_kernel(%arg0: memref<8x24xf32, #tpu.memory_space<vmem>>, %arg1: memref<8x4xf32, #tpu.memory_space<vmem>>, %arg2: memref<24x256xbf16, #tpu.memory_space<vmem>>, %arg3: memref<4x256xbf16, #tpu.memory_space<vmem>>, %arg4: memref<1x256xf32, #tpu.memory_space<vmem>>, %arg5: memref<256x128xbf16, #tpu.memory_space<vmem>>, %arg6: memref<1x128xf32, #tpu.memory_space<vmem>>, %arg7: memref<128x128xbf16, #tpu.memory_space<vmem>>, %arg8: memref<1x128xf32, #tpu.memory_space<vmem>>, %arg9: memref<1x256xf32, #tpu.memory_space<vmem>>, %arg10: memref<1x256xf32, #tpu.memory_space<vmem>>, %arg11: memref<8x128xf32, #tpu.memory_space<vmem>>) attributes {dimension_semantics = [], scalar_prefetch = 0 : i64, scratch_operands = 0 : i64, tpu.core_type = #tpu.core_type<tc>} {
    %c0 = arith.constant 0 : index
    %c0_0 = arith.constant 0 : index
    %0 = vector.load %arg0[%c0, %c0_0] : memref<8x24xf32, #tpu.memory_space<vmem>>, vector<8x24xf32>
    %1 = arith.truncf %0 : vector<8x24xf32> to vector<8x24xbf16>
    %c0_1 = arith.constant 0 : index
    %c0_2 = arith.constant 0 : index
    %2 = vector.load %arg1[%c0_1, %c0_2] : memref<8x4xf32, #tpu.memory_space<vmem>>, vector<8x4xf32>
    %3 = arith.truncf %2 : vector<8x4xf32> to vector<8x4xbf16>
    %c0_3 = arith.constant 0 : index
    %c0_4 = arith.constant 0 : index
    %4 = vector.load %arg2[%c0_3, %c0_4] : memref<24x256xbf16, #tpu.memory_space<vmem>>, vector<24x256xbf16>
    %cst = arith.constant dense<0.000000e+00> : vector<8x256xf32>
    %5 = tpu.matmul %1, %4, %cst {dimension_numbers = #tpu.dot_dimension_numbers<[1], [0], [0], [1], [0, 0, 1, 1], [], []>} : vector<8x24xbf16>, vector<24x256xbf16>, vector<8x256xf32> -> vector<8x256xf32>
    %c0_5 = arith.constant 0 : index
    %c0_6 = arith.constant 0 : index
    %6 = vector.load %arg3[%c0_5, %c0_6] : memref<4x256xbf16, #tpu.memory_space<vmem>>, vector<4x256xbf16>
    %cst_7 = arith.constant dense<0.000000e+00> : vector<8x256xf32>
    %7 = tpu.matmul %3, %6, %cst_7 {dimension_numbers = #tpu.dot_dimension_numbers<[1], [0], [0], [1], [0, 0, 1, 1], [], []>} : vector<8x4xbf16>, vector<4x256xbf16>, vector<8x256xf32> -> vector<8x256xf32>
    %8 = arith.addf %5, %7 : vector<8x256xf32>
    %c0_8 = arith.constant 0 : index
    %c0_9 = arith.constant 0 : index
    %9 = vector.load %arg4[%c0_8, %c0_9] : memref<1x256xf32, #tpu.memory_space<vmem>>, vector<1x256xf32>
    %10 = vector.broadcast %9 : vector<1x256xf32> to vector<8x256xf32>
    %11 = arith.addf %8, %10 : vector<8x256xf32>
    %cst_10 = arith.constant 0.000000e+00 : f32
    %12 = vector.broadcast %cst_10 : f32 to vector<8x256xf32>
    %13 = arith.maximumf %11, %12 : vector<8x256xf32>
    %cst_11 = arith.constant dense<0.000000e+00> : vector<256xf32>
    %14 = vector.multi_reduction <add>, %13, %cst_11 [0] : vector<8x256xf32> to vector<256xf32>
    %15 = vector.shape_cast %14 : vector<256xf32> to vector<1x256xf32>
    %cst_12 = arith.constant 1.250000e-01 : f32
    %16 = vector.broadcast %cst_12 : f32 to vector<1x256xf32>
    %17 = arith.mulf %15, %16 : vector<1x256xf32>
    %18 = arith.mulf %13, %13 : vector<8x256xf32>
    %cst_13 = arith.constant dense<0.000000e+00> : vector<256xf32>
    %19 = vector.multi_reduction <add>, %18, %cst_13 [0] : vector<8x256xf32> to vector<256xf32>
    %20 = vector.shape_cast %19 : vector<256xf32> to vector<1x256xf32>
    %cst_14 = arith.constant 1.250000e-01 : f32
    %21 = vector.broadcast %cst_14 : f32 to vector<1x256xf32>
    %22 = arith.mulf %20, %21 : vector<1x256xf32>
    %23 = arith.mulf %17, %17 : vector<1x256xf32>
    %24 = arith.subf %22, %23 : vector<1x256xf32>
    %cst_15 = arith.constant 9.99999974E-6 : f32
    %25 = vector.broadcast %cst_15 : f32 to vector<1x256xf32>
    %26 = arith.addf %24, %25 : vector<1x256xf32>
    %27 = math.rsqrt %26 : vector<1x256xf32>
    %c0_16 = arith.constant 0 : index
    %c0_17 = arith.constant 0 : index
    %28 = vector.load %arg9[%c0_16, %c0_17] : memref<1x256xf32, #tpu.memory_space<vmem>>, vector<1x256xf32>
    %29 = arith.mulf %28, %27 : vector<1x256xf32>
    %c0_18 = arith.constant 0 : index
    %c0_19 = arith.constant 0 : index
    %30 = vector.load %arg10[%c0_18, %c0_19] : memref<1x256xf32, #tpu.memory_space<vmem>>, vector<1x256xf32>
    %31 = arith.mulf %17, %29 : vector<1x256xf32>
    %32 = arith.subf %30, %31 : vector<1x256xf32>
    %33 = vector.broadcast %29 : vector<1x256xf32> to vector<8x256xf32>
    %34 = arith.mulf %13, %33 : vector<8x256xf32>
    %35 = vector.broadcast %32 : vector<1x256xf32> to vector<8x256xf32>
    %36 = arith.addf %34, %35 : vector<8x256xf32>
    %37 = arith.truncf %36 : vector<8x256xf32> to vector<8x256xbf16>
    %c0_20 = arith.constant 0 : index
    %c0_21 = arith.constant 0 : index
    %38 = vector.load %arg5[%c0_20, %c0_21] : memref<256x128xbf16, #tpu.memory_space<vmem>>, vector<256x128xbf16>
    %cst_22 = arith.constant dense<0.000000e+00> : vector<8x128xf32>
    %39 = tpu.matmul %37, %38, %cst_22 {dimension_numbers = #tpu.dot_dimension_numbers<[1], [0], [0], [1], [0, 0, 1, 1], [], []>} : vector<8x256xbf16>, vector<256x128xbf16>, vector<8x128xf32> -> vector<8x128xf32>
    %c0_23 = arith.constant 0 : index
    %c0_24 = arith.constant 0 : index
    %40 = vector.load %arg6[%c0_23, %c0_24] : memref<1x128xf32, #tpu.memory_space<vmem>>, vector<1x128xf32>
    %41 = vector.broadcast %40 : vector<1x128xf32> to vector<8x128xf32>
    %42 = arith.addf %39, %41 : vector<8x128xf32>
    %cst_25 = arith.constant 0.000000e+00 : f32
    %43 = vector.broadcast %cst_25 : f32 to vector<8x128xf32>
    %44 = arith.maximumf %42, %43 : vector<8x128xf32>
    %45 = arith.truncf %44 : vector<8x128xf32> to vector<8x128xbf16>
    %c0_26 = arith.constant 0 : index
    %c0_27 = arith.constant 0 : index
    %46 = vector.load %arg7[%c0_26, %c0_27] : memref<128x128xbf16, #tpu.memory_space<vmem>>, vector<128x128xbf16>
    %cst_28 = arith.constant dense<0.000000e+00> : vector<8x128xf32>
    %47 = tpu.matmul %45, %46, %cst_28 {dimension_numbers = #tpu.dot_dimension_numbers<[1], [0], [0], [1], [0, 0, 1, 1], [], []>} : vector<8x128xbf16>, vector<128x128xbf16>, vector<8x128xf32> -> vector<8x128xf32>
    %c0_29 = arith.constant 0 : index
    %c0_30 = arith.constant 0 : index
    %48 = vector.load %arg8[%c0_29, %c0_30] : memref<1x128xf32, #tpu.memory_space<vmem>>, vector<1x128xf32>
    %49 = vector.broadcast %48 : vector<1x128xf32> to vector<8x128xf32>
    %50 = arith.addf %47, %49 : vector<8x128xf32>
    %c0_31 = arith.constant 0 : index
    %c0_32 = arith.constant 0 : index
    %51 = vector.load %arg11[%c0_31, %c0_32] : memref<8x128xf32, #tpu.memory_space<vmem>>, vector<8x128xf32>
    tpu.vector_store %arg11[%c0_31, %c0_32], %50 {strides = array<i32>} : memref<8x128xf32, #tpu.memory_space<vmem>>, vector<8x128xf32>,
    return
  }
}

</mosaic_0001>

<llo_original>
// kernel: _critic_forward_impl.1
$region0: #{_critic_forward_impl.1}
  #allocation0 [shape = 'u32[]', space=smem, size = 0x4, offset = 0x4, fixed_abs, tag = 'smem constant byte address 0x4 - core index']
  #allocation1 [shape = 'u32[144,128]{1,0:T(1,128)}', space=vmem, size = 0x12000, scoped, tag = 'internal scratch']
  %s0 = inlined_call_operand.vmem [shape: f32[8,24], index: 0, kind: input, shape index: {}]
  %s1 = inlined_call_operand.vmem [shape: f32[8,4], index: 1, kind: input, shape index: {}]
  %s2 = inlined_call_operand.vmem [shape: bf16[24,256], index: 2, kind: input, shape index: {}]
  %s3 = inlined_call_operand.vmem [shape: bf16[4,256], index: 3, kind: input, shape index: {}]
  %s4 = inlined_call_operand.vmem [shape: f32[1,256], index: 4, kind: input, shape index: {}]
  %s5 = inlined_call_operand.hbm [shape: bf16[256,128], index: 5, kind: input, shape index: {}]
  %s6 = inlined_call_operand.hbm [shape: f32[1,128], index: 6, kind: input, shape index: {}]
  %s7 = inlined_call_operand.hbm [shape: bf16[128,128], index: 7, kind: input, shape index: {}]
  %s8 = inlined_call_operand.hbm [shape: f32[1,128], index: 8, kind: input, shape index: {}]
  %s9 = inlined_call_operand.vmem [shape: f32[1,256], index: 9, kind: input, shape index: {}]
  %s10 = inlined_call_operand.vmem [shape: f32[1,256], index: 10, kind: input, shape index: {}]
  %s11 = inlined_call_operand.vmem [shape: f32[8,128], index: 11, kind: output, shape index: {}]
  %s12 = sld [smem:[#allocation0]]
  $region70: #{_critic_forward_impl.1} parent=0
    _
  %s14 = ssub.s32 1, %s12
  %s15 = scalar_select 0, %s14, %s12
  $region1: #{_critic_forward_impl.1} parent=0
    #allocation2 [shape = 'u8[65536]{0}', space=vmem, size = 0x10000, scoped, tag = 'input window, operand 5, single buffered']
    #allocation3 [shape = 's32[1]{0}', space=sflag, size = 0x4, scoped, tag = 'scoped memory for _critic_forward_impl.1']
    #allocation4 [shape = 'u8[512]{0}', space=vmem, size = 0x400, scoped, tag = 'input window, operand 6, single buffered']
    #allocation5 [shape = 's32[1]{0}', space=sflag, size = 0x4, scoped, tag = 'scoped memory for _critic_forward_impl.1']
    #allocation6 [shape = 'u8[32768]{0}', space=vmem, size = 0x8000, scoped, tag = 'input window, operand 7, single buffered']
    #allocation7 [shape = 'u8[512]{0}', space=vmem, size = 0x400, scoped, tag = 'input window, operand 8, single buffered']
    #allocation8 [shape = 's32[1]{0}', space=sflag, size = 0x4, scoped, tag = 'scoped memory for _critic_forward_impl.1']
    %16 = vsyncpa [#allocation3], 0
    %17 = vsyncpa [#allocation5], 0
    %18 = vsyncpa [#allocation8], 0
    // Predicated region
    $region2: #{_critic_forward_impl.1} parent=1 // pred_check
      _
    $region3: #{_critic_forward_impl.1} parent=1 // pred_check_branch
      %20 = sbr.rel (0) target = $region5
    $region4: #{_critic_forward_impl.1} parent=1 // pred_region
      _
    $region5: #{_critic_forward_impl.1} parent=1 // pred_fallthru
      _
    // Predicated region
    $region6: #{_critic_forward_impl.1} parent=1 // pred_check
      _
    $region7: #{_critic_forward_impl.1} parent=1 // pred_check_branch
      %22 = sbr.rel (0) target = $region9
    $region8: #{_critic_forward_impl.1} parent=1 // pred_region
      _
    $region9: #{_critic_forward_impl.1} parent=1 // pred_fallthru
      _
    // Predicated region
    $region10: #{_critic_forward_impl.1} parent=1 // pred_check
      _
    $region11: #{_critic_forward_impl.1} parent=1 // pred_check_branch
      %24 = sbr.rel (0) target = $region13
    $region12: #{_critic_forward_impl.1} parent=1 // pred_region
      _
    $region13: #{_critic_forward_impl.1} parent=1 // pred_fallthru
      _
    // Predicated region
    $region14: #{_critic_forward_impl.1} parent=1 // pred_check
      _
    $region15: #{_critic_forward_impl.1} parent=1 // pred_check_branch
      %26 = sbr.rel (0) target = $region17
    $region16: #{_critic_forward_impl.1} parent=1 // pred_region
      _
    $region17: #{_critic_forward_impl.1} parent=1 // pred_fallthru
      _
    // Predicated region
    $region18: #{_critic_forward_impl.1} parent=1 // pred_check
      _
    $region19: #{_critic_forward_impl.1} parent=1 // pred_check_branch
      %28 = sbr.rel (0) target = $region21
    $region20: #{_critic_forward_impl.1} parent=1 // pred_region
      _
    $region21: #{_critic_forward_impl.1} parent=1 // pred_fallthru
      _
    // Predicated region
    $region22: #{_critic_forward_impl.1} parent=1 // pred_check
      _
    $region23: #{_critic_forward_impl.1} parent=1 // pred_check_branch
      %30 = sbr.rel (0) target = $region25
    $region24: #{_critic_forward_impl.1} parent=1 // pred_region
      %s32 = ssub.s32 2048, 2048
      %33 = vsyncadd [#allocation3], %s32
      %s34 = sshll.u32 [#allocation2], 4
      %s35 = int_to_ptr.vmem [resolvable:$true] %s34
      %40 = dma.hbm_to_vmem [thread:$0]  %s5, 2048, %s35, [#allocation3], 64, 64, 4
    $region25: #{_critic_forward_impl.1} parent=1 // pred_fallthru
      _
    // Predicated region
    $region26: #{_critic_forward_impl.1} parent=1 // pred_check
      _
    $region27: #{_critic_forward_impl.1} parent=1 // pred_check_branch
      %42 = sbr.rel (0) target = $region29
    $region28: #{_critic_forward_impl.1} parent=1 // pred_region
      %s44 = ssub.s32 16, 16
      %45 = vsyncadd [#allocation5], %s44
      %s47 = sshll.u32 [#allocation4], 4
      %s48 = int_to_ptr.vmem [resolvable:$true] %s47
      %50 = dma.hbm_to_vmem [thread:$0]  %s6, 16, %s48, [#allocation5]
    $region29: #{_critic_forward_impl.1} parent=1 // pred_fallthru
      _
    // Predicated region
    $region30: #{_critic_forward_impl.1} parent=1 // pred_check
      _
    $region31: #{_critic_forward_impl.1} parent=1 // pred_check_branch
      %52 = sbr.rel (0) target = $region33
    $region32: #{_critic_forward_impl.1} parent=1 // pred_region
      %s54 = ssub.s32 1024, 1024
      %55 = vsyncadd [#allocation5], %s54
      %s56 = sshll.u32 [#allocation6], 4
      %s57 = int_to_ptr.vmem [resolvable:$true] %s56
      %62 = dma.hbm_to_vmem [thread:$0]  %s7, 1024, %s57, [#allocation5], 64, 64, 4
    $region33: #{_critic_forward_impl.1} parent=1 // pred_fallthru
      _
    // Predicated region
    $region34: #{_critic_forward_impl.1} parent=1 // pred_check
      _
    $region35: #{_critic_forward_impl.1} parent=1 // pred_check_branch
      %64 = sbr.rel (0) target = $region37
    $region36: #{_critic_forward_impl.1} parent=1 // pred_region
      %s66 = ssub.s32 16, 16
      %67 = vsyncadd [#allocation8], %s66
      %s69 = sshll.u32 [#allocation7], 4
      %s70 = int_to_ptr.vmem [resolvable:$true] %s69
      %72 = dma.hbm_to_vmem [thread:$0]  %s8, 16, %s70, [#allocation8]
    $region37: #{_critic_forward_impl.1} parent=1 // pred_fallthru
      _
    // Predicated region
    $region38: #{_critic_forward_impl.1} parent=1 // pred_check
      _
    $region39: #{_critic_forward_impl.1} parent=1 // pred_check_branch
      %74 = sbr.rel (0) target = $region41
    $region40: #{_critic_forward_impl.1} parent=1 // pred_region
      _
    $region41: #{_critic_forward_impl.1} parent=1 // pred_fallthru
      _
    // Predicated region
    $region42: #{_critic_forward_impl.1} parent=1 // pred_check
      _
    $region43: #{_critic_forward_impl.1} parent=1 // pred_check_branch
      %76 = sbr.rel (0) target = $region45
    $region44: #{_critic_forward_impl.1} parent=1 // pred_region
      _
    $region45: #{_critic_forward_impl.1} parent=1 // pred_fallthru
      _
    // Predicated region
    $region46: #{_critic_forward_impl.1} parent=1 // pred_check
      _
    $region47: #{_critic_forward_impl.1} parent=1 // pred_check_branch
      %78 = sbr.rel (0) target = $region49
    $region48: #{_critic_forward_impl.1} parent=1 // pred_region
      %79 = dma.done [#allocation3], 2048
    $region49: #{_critic_forward_impl.1} parent=1 // pred_fallthru
      _
    // Predicated region
    $region50: #{_critic_forward_impl.1} parent=1 // pred_check
      _
    $region51: #{_critic_forward_impl.1} parent=1 // pred_check_branch
      %81 = sbr.rel (0) target = $region53
    $region52: #{_critic_forward_impl.1} parent=1 // pred_region
      %82 = dma.done [#allocation5], 16
    $region53: #{_critic_forward_impl.1} parent=1 // pred_fallthru
      _
    // Predicated region
    $region54: #{_critic_forward_impl.1} parent=1 // pred_check
      _
    $region55: #{_critic_forward_impl.1} parent=1 // pred_check_branch
      %84 = sbr.rel (0) target = $region57
    $region56: #{_critic_forward_impl.1} parent=1 // pred_region
      %85 = dma.done [#allocation5], 1024
    $region57: #{_critic_forward_impl.1} parent=1 // pred_fallthru
      _
    // Predicated region
    $region58: #{_critic_forward_impl.1} parent=1 // pred_check
      _
    $region59: #{_critic_forward_impl.1} parent=1 // pred_check_branch
      %87 = sbr.rel (0) target = $region61
    $region60: #{_critic_forward_impl.1} parent=1 // pred_region
      %88 = dma.done [#allocation8], 16
    $region61: #{_critic_forward_impl.1} parent=1 // pred_fallthru
      _
    %v90 = vld [vmem:[%s0] sm:$0xff]
    %v91 = vpack.c.bf16 %v90, %v90
    %v92 = vld [vmem:[%s1] sm:$0xff]
    %v93 = vpack.c.bf16 %v92, %v92
    %v94 = vld [vmem:[%s2] sm:$0xff]
    %v95 = vld [vmem:[%s2 + $0x8] sm:$0xff]
    %v96 = vld [vmem:[%s2 + $0x10] sm:$0xff]
    %v97 = vld [vmem:[%s3] sm:$0xf]
    %v100 = vunpack.c.l.s4 1983009808
    %v101 = vunpack.c.0.s8 %v100
    %v102 = vlaneseq
    %v103 = vshrl.u32 %v102, 7
    %v104 = vsub.s32 %v101, %v103
    %v105 = vrot.slane %v97, %v104
    %v106 = vcombine.high %v105, %v105
    %vm107 = vcmask 31744
    %v109 = vsel %vm107, %v93, 0
    %vm111 = vcmask 1041408
    %v113 = vsel %vm111, %v105, 0
    %v116 = vsel %vm111, %v106, 0
    %118 = vmatprep.subr.bf16.mxu0 %v116
    %119 = vmatpush1.bf16.msra.mxu0 %v113
    %120 = vmatprep.subr.bf16.mxu0 0
    %121 = vmatpush1.bf16.msra.mxu0 0
    %122 = vmatprep.subr.bf16.mxu0 0
    %123 = vmatpush1.bf16.msra.mxu0 0
    %124 = vmatprep.subr.bf16.mxu0 0
    %125 = vmatpush1.bf16.msra.mxu0 0
    %126 = vmatprep.subr.bf16.mxu0 0
    %127 = vmatpush1.bf16.msra.mxu0 0
    %128 = vmatprep.subr.bf16.mxu0 0
    %129 = vmatpush1.bf16.msra.mxu0 0
    %130 = vmatprep.subr.bf16.mxu0 0
    %131 = vmatpush1.bf16.msra.mxu0 0
    %132 = vmatprep.subr.bf16.mxu0 0
    %133 = vmatpush1.bf16.msra.mxu0 0
    %134 = vmatprep.subr.bf16.mxu0 0
    %135 = vmatpush1.bf16.msra.mxu0 0
    %136 = vmatprep.subr.bf16.mxu0 0
    %137 = vmatpush1.bf16.msra.mxu0 0
    %138 = vmatprep.subr.bf16.mxu0 0
    %139 = vmatpush1.bf16.msra.mxu0 0
    %140 = vmatprep.subr.bf16.mxu0 0
    %141 = vmatpush1.bf16.msra.mxu0 0
    %142 = vmatprep.subr.bf16.mxu0 0
    %143 = vmatpush1.bf16.msra.mxu0 0
    %144 = vmatprep.subr.bf16.mxu0 0
    %145 = vmatpush1.bf16.msra.mxu0 0
    %146 = vmatprep.subr.bf16.mxu0 0
    %147 = vmatpush1.bf16.msra.mxu0 0
    %148 = vmatprep.subr.bf16.mxu0 0
    %149 = vmatpush1.bf16.msra.mxu0 0
    %150 = vmatprep.mubr.bf16.mxu0 0
    %151 = vmatmul.mubr.bf16.gmra.mrb[0].mxu0 %v109
    %v152 = vpop.f32.mrb[0].mxu0
    %v153 = vadd.f32 0.0, %v152
    %v154 = vpop.f32.mrb[0].mxu0
    %v155 = vadd.f32 0.0, %v154
    %v156 = vpop.f32.mrb[0].mxu0
    %v157 = vpop.f32.mrb[0].mxu0
    %158 = vdwg.mxu0
    %v162 = vunpack.c.l.b16 %v94
    %v163 = vunpack.c.h.b16 %v94
    %v164 = vunpack.c.l.b16 %v95
    %v165 = vunpack.c.h.b16 %v95
    %v166 = vunpack.c.l.b16 %v96
    %v167 = vunpack.c.h.b16 %v96
    %v168 = vpack.c.b16 %v164, %v162
    %v169 = vpack.c.b16 %v165, %v163
    %v170 = vpack.c.b16 %v166, %v166
    %v171 = vpack.c.b16 %v167, %v167
    %vm174 = vcmask 195584
    %v176 = vsel %vm174, %v91, 0
    %vm178 = vcmask 1043456
    %v180 = vsel %vm178, %v170, 0
    %v183 = vsel %vm178, %v171, 0
    %185 = vmatprep.subr.bf16.mxu0 %v169
    %186 = vmatpush1.bf16.msra.mxu0 %v168
    %187 = vmatprep.subr.bf16.mxu0 %v183
    %188 = vmatpush1.bf16.msra.mxu0 %v180
    %189 = vmatprep.subr.bf16.mxu0 0
    %190 = vmatpush1.bf16.msra.mxu0 0
    %191 = vmatprep.subr.bf16.mxu0 0
    %192 = vmatpush1.bf16.msra.mxu0 0
    %193 = vmatprep.subr.bf16.mxu0 0
    %194 = vmatpush1.bf16.msra.mxu0 0
    %195 = vmatprep.subr.bf16.mxu0 0
    %196 = vmatpush1.bf16.msra.mxu0 0
    %197 = vmatprep.subr.bf16.mxu0 0
    %198 = vmatpush1.bf16.msra.mxu0 0
    %199 = vmatprep.subr.bf16.mxu0 0
    %200 = vmatpush1.bf16.msra.mxu0 0
    %201 = vmatprep.subr.bf16.mxu0 0
    %202 = vmatpush1.bf16.msra.mxu0 0
    %203 = vmatprep.subr.bf16.mxu0 0
    %204 = vmatpush1.bf16.msra.mxu0 0
    %205 = vmatprep.subr.bf16.mxu0 0
    %206 = vmatpush1.bf16.msra.mxu0 0
    %207 = vmatprep.subr.bf16.mxu0 0
    %208 = vmatpush1.bf16.msra.mxu0 0
    %209 = vmatprep.subr.bf16.mxu0 0
    %210 = vmatpush1.bf16.msra.mxu0 0
    %211 = vmatprep.subr.bf16.mxu0 0
    %212 = vmatpush1.bf16.msra.mxu0 0
    %213 = vmatprep.subr.bf16.mxu0 0
    %214 = vmatpush1.bf16.msra.mxu0 0
    %215 = vmatprep.subr.bf16.mxu0 0
    %216 = vmatpush1.bf16.msra.mxu0 0
    %217 = vmatprep.mubr.bf16.mxu0 0
    %218 = vmatmul.mubr.bf16.gmra.mrb[0].mxu0 %v176
    %v219 = vpop.f32.mrb[0].mxu0
    %v220 = vadd.f32 %v153, %v219
    %v221 = vpop.f32.mrb[0].mxu0
    %v222 = vadd.f32 %v155, %v221
    %v223 = vpop.f32.mrb[0].mxu0
    %v224 = vpop.f32.mrb[0].mxu0
    %225 = vdwg.mxu0
    %v226 = vld [vmem:[%s4] sm:$0x3]
    %v228 = vlaneseq
    %v229 = vshrl.u32 %v228, 7
    %v230 = vsub.s32 0, %v229
    %v231 = vrot.slane %v226, %v230
    %v232 = vlaneseq
    %v233 = vshrl.u32 %v232, 7
    %v234 = vsub.s32 1, %v233
    %v235 = vrot.slane %v226, %v234
    %v238 = vadd.f32 %v220, %v231
    %v239 = vadd.f32 %v222, %v235
    %v240 = vmax.f32 %v238, 0.0
    %v241 = vmax.f32 %v239, 0.0
    %v242 = vrot.slane %v240, 4
    %v243 = vadd.f32 %v240, %v242
    %v244 = vrot.slane %v243, 2
    %v245 = vadd.f32 %v243, %v244
    %v246 = vrot.slane %v245, 1
    %v247 = vadd.f32 %v245, %v246
    %v248 = vrot.slane %v241, 4
    %v249 = vadd.f32 %v241, %v248
    %v250 = vrot.slane %v249, 2
    %v251 = vadd.f32 %v249, %v250
    %v252 = vrot.slane %v251, 1
    %v253 = vadd.f32 %v251, %v252
    %v254 = vmul.f32 %v247, 0.125
    %v255 = vmul.f32 %v253, 0.125
    %v256 = vmul.f32 %v240, %v240
    %v257 = vmul.f32 %v241, %v241
    %v258 = vrot.slane %v256, 4
    %v259 = vadd.f32 %v256, %v258
    %v260 = vrot.slane %v259, 2
    %v261 = vadd.f32 %v259, %v260
    %v262 = vrot.slane %v261, 1
    %v263 = vadd.f32 %v261, %v262
    %v264 = vrot.slane %v257, 4
    %v265 = vadd.f32 %v257, %v264
    %v266 = vrot.slane %v265, 2
    %v267 = vadd.f32 %v265, %v266
    %v268 = vrot.slane %v267, 1
    %v269 = vadd.f32 %v267, %v268
    %v270 = vmul.f32 %v263, 0.125
    %v271 = vmul.f32 %v269, 0.125
    %v272 = vmul.f32 %v254, %v254
    %v273 = vmul.f32 %v255, %v255
    %v274 = vsub.f32 %v270, %v272
    %v275 = vsub.f32 %v271, %v273
    %v276 = vadd.f32 %v274, 1e-05
    %v277 = vadd.f32 %v275, 1e-05
    %v278 = vrsqrt.pop %v276
    %v279 = vrsqrt.pop %v277
    %v280 = vld [vmem:[%s9] sm:$0x3]
    %v283 = vcombine.low %v278, %v279
    %v285 = vunpack.c.l.s4 1966171168
    %v286 = vunpack.c.0.s8 %v285
    %v287 = vlaneseq
    %v288 = vshrl.u32 %v287, 7
    %v289 = vsub.s32 %v286, %v288
    %v290 = vrot.slane %v283, %v289
    %v292 = vunpack.c.l.s4 1966171168
    %v293 = vunpack.c.0.s8 %v292
    %v294 = vlaneseq
    %v295 = vshrl.u32 %v294, 7
    %v296 = vsub.s32 %v293, %v295
    %v297 = vrot.slane %v290, %v296
    %v299 = vmul.f32 %v280, %v297
    %v300 = vld [vmem:[%s10] sm:$0x3]
    %v302 = vlaneseq
    %v303 = vshrl.u32 %v302, 7
    %v304 = vsub.s32 0, %v303
    %v305 = vrot.slane %v299, %v304
    %v306 = vlaneseq
    %v307 = vshrl.u32 %v306, 7
    %v308 = vsub.s32 1, %v307
    %v309 = vrot.slane %v299, %v308
    %v312 = vmul.f32 %v254, %v305
    %v313 = vmul.f32 %v255, %v309
    %v316 = vcombine.low %v312, %v313
    %v318 = vunpack.c.l.s4 1966171168
    %v319 = vunpack.c.0.s8 %v318
    %v320 = vlaneseq
    %v321 = vshrl.u32 %v320, 7
    %v322 = vsub.s32 %v319, %v321
    %v323 = vrot.slane %v316, %v322
    %v325 = vunpack.c.l.s4 1966171168
    %v326 = vunpack.c.0.s8 %v325
    %v327 = vlaneseq
    %v328 = vshrl.u32 %v327, 7
    %v329 = vsub.s32 %v326, %v328
    %v330 = vrot.slane %v323, %v329
    %v332 = vsub.f32 %v300, %v330
    %v333 = vmul.f32 %v240, %v305
    %v334 = vmul.f32 %v241, %v309
    %v336 = vlaneseq
    %v337 = vshrl.u32 %v336, 7
    %v338 = vsub.s32 0, %v337
    %v339 = vrot.slane %v332, %v338
    %v340 = vlaneseq
    %v341 = vshrl.u32 %v340, 7
    %v342 = vsub.s32 1, %v341
    %v343 = vrot.slane %v332, %v342
    %v346 = vadd.f32 %v333, %v339
    %v347 = vadd.f32 %v334, %v343
    %v348 = vpack.c.bf16 %v346, %v346
    %v349 = vpack.c.bf16 %v347, %v347
    %v350 = vld [vmem:[#allocation2] sm:$0xf]
    %v351 = vld [vmem:[#allocation2 + $0x4] sm:$0xf]
    %v352 = vld [vmem:[#allocation2 + $0x8] sm:$0xf]
    %v353 = vld [vmem:[#allocation2 + $0xc] sm:$0xf]
    %v354 = vld [vmem:[#allocation2 + $0x10] sm:$0xf]
    %v355 = vld [vmem:[#allocation2 + $0x14] sm:$0xf]
    %v356 = vld [vmem:[#allocation2 + $0x18] sm:$0xf]
    %v357 = vld [vmem:[#allocation2 + $0x1c] sm:$0xf]
    %v358 = vld [vmem:[#allocation2 + $0x20] sm:$0xf]
    %v359 = vld [vmem:[#allocation2 + $0x24] sm:$0xf]
    %v360 = vld [vmem:[#allocation2 + $0x28] sm:$0xf]
    %v361 = vld [vmem:[#allocation2 + $0x2c] sm:$0xf]
    %v362 = vld [vmem:[#allocation2 + $0x30] sm:$0xf]
    %v363 = vld [vmem:[#allocation2 + $0x34] sm:$0xf]
    %v364 = vld [vmem:[#allocation2 + $0x38] sm:$0xf]
    %v365 = vld [vmem:[#allocation2 + $0x3c] sm:$0xf]
    %v366 = vld [vmem:[#allocation2 + $0x40] sm:$0xf]
    %v367 = vld [vmem:[#allocation2 + $0x44] sm:$0xf]
    %v368 = vld [vmem:[#allocation2 + $0x48] sm:$0xf]
    %v369 = vld [vmem:[#allocation2 + $0x4c] sm:$0xf]
    %v370 = vld [vmem:[#allocation2 + $0x50] sm:$0xf]
    %v371 = vld [vmem:[#allocation2 + $0x54] sm:$0xf]
    %v372 = vld [vmem:[#allocation2 + $0x58] sm:$0xf]
    %v373 = vld [vmem:[#allocation2 + $0x5c] sm:$0xf]
    %v374 = vld [vmem:[#allocation2 + $0x60] sm:$0xf]
    %v375 = vld [vmem:[#allocation2 + $0x64] sm:$0xf]
    %v376 = vld [vmem:[#allocation2 + $0x68] sm:$0xf]
    %v377 = vld [vmem:[#allocation2 + $0x6c] sm:$0xf]
    %v378 = vld [vmem:[#allocation2 + $0x70] sm:$0xf]
    %v379 = vld [vmem:[#allocation2 + $0x74] sm:$0xf]
    %v380 = vld [vmem:[#allocation2 + $0x78] sm:$0xf]
    %v381 = vld [vmem:[#allocation2 + $0x7c] sm:$0xf]
    %v382 = vld [vmem:[#allocation4] sm:$0x1]
    %v384 = vlaneseq
    %v385 = vshrl.u32 %v384, 7
    %v386 = vsub.s32 0, %v385
    %v387 = vrot.slane %v382, %v386
    %v421 = vunpack.c.l.b16 %v350
    %v422 = vunpack.c.l.b16 %v351
    %v423 = vunpack.c.l.b16 %v352
    %v424 = vunpack.c.l.b16 %v353
    %v425 = vunpack.c.l.b16 %v354
    %v426 = vunpack.c.l.b16 %v355
    %v427 = vunpack.c.l.b16 %v356
    %v428 = vunpack.c.l.b16 %v357
    %v429 = vunpack.c.l.b16 %v358
    %v430 = vunpack.c.l.b16 %v359
    %v431 = vunpack.c.l.b16 %v360
    %v432 = vunpack.c.l.b16 %v361
    %v433 = vunpack.c.l.b16 %v362
    %v434 = vunpack.c.l.b16 %v363
    %v435 = vunpack.c.l.b16 %v364
    %v436 = vunpack.c.l.b16 %v365
    %v437 = vunpack.c.l.b16 %v366
    %v438 = vunpack.c.l.b16 %v367
    %v439 = vunpack.c.l.b16 %v368
    %v440 = vunpack.c.l.b16 %v369
    %v441 = vunpack.c.l.b16 %v370
    %v442 = vunpack.c.l.b16 %v371
    %v443 = vunpack.c.l.b16 %v372
    %v444 = vunpack.c.l.b16 %v373
    %v445 = vunpack.c.l.b16 %v374
    %v446 = vunpack.c.l.b16 %v375
    %v447 = vunpack.c.l.b16 %v376
    %v448 = vunpack.c.l.b16 %v377
    %v449 = vunpack.c.l.b16 %v378
    %v450 = vunpack.c.l.b16 %v379
    %v451 = vunpack.c.l.b16 %v380
    %v452 = vunpack.c.l.b16 %v381
    %v453 = vpack.c.b16 %v422, %v421
    %v454 = vpack.c.b16 %v424, %v423
    %v455 = vpack.c.b16 %v426, %v425
    %v456 = vpack.c.b16 %v428, %v427
    %v457 = vpack.c.b16 %v430, %v429
    %v458 = vpack.c.b16 %v432, %v431
    %v459 = vpack.c.b16 %v434, %v433
    %v460 = vpack.c.b16 %v436, %v435
    %v461 = vpack.c.b16 %v438, %v437
    %v462 = vpack.c.b16 %v440, %v439
    %v463 = vpack.c.b16 %v442, %v441
    %v464 = vpack.c.b16 %v444, %v443
    %v465 = vpack.c.b16 %v446, %v445
    %v466 = vpack.c.b16 %v448, %v447
    %v467 = vpack.c.b16 %v450, %v449
    %v468 = vpack.c.b16 %v452, %v451
    %485 = vmatprep.subr.bf16.mxu0 0
    %486 = vmatpush1.bf16.msra.mxu0 %v453
    %487 = vmatprep.subr.bf16.mxu0 0
    %488 = vmatpush1.bf16.msra.mxu0 %v454
    %489 = vmatprep.subr.bf16.mxu0 0
    %490 = vmatpush1.bf16.msra.mxu0 %v455
    %491 = vmatprep.subr.bf16.mxu0 0
    %492 = vmatpush1.bf16.msra.mxu0 %v456
    %493 = vmatprep.subr.bf16.mxu0 0
    %494 = vmatpush1.bf16.msra.mxu0 %v457
    %495 = vmatprep.subr.bf16.mxu0 0
    %496 = vmatpush1.bf16.msra.mxu0 %v458
    %497 = vmatprep.subr.bf16.mxu0 0
    %498 = vmatpush1.bf16.msra.mxu0 %v459
    %499 = vmatprep.subr.bf16.mxu0 0
    %500 = vmatpush1.bf16.msra.mxu0 %v460
    %501 = vmatprep.subr.bf16.mxu0 0
    %502 = vmatpush1.bf16.msra.mxu0 %v461
    %503 = vmatprep.subr.bf16.mxu0 0
    %504 = vmatpush1.bf16.msra.mxu0 %v462
    %505 = vmatprep.subr.bf16.mxu0 0
    %506 = vmatpush1.bf16.msra.mxu0 %v463
    %507 = vmatprep.subr.bf16.mxu0 0
    %508 = vmatpush1.bf16.msra.mxu0 %v464
    %509 = vmatprep.subr.bf16.mxu0 0
    %510 = vmatpush1.bf16.msra.mxu0 %v465
    %511 = vmatprep.subr.bf16.mxu0 0
    %512 = vmatpush1.bf16.msra.mxu0 %v466
    %513 = vmatprep.subr.bf16.mxu0 0
    %514 = vmatpush1.bf16.msra.mxu0 %v467
    %515 = vmatprep.subr.bf16.mxu0 0
    %516 = vmatpush1.bf16.msra.mxu0 %v468
    %517 = vmatprep.mubr.bf16.mxu0 %v349
    %518 = vmatmul.mubr.bf16.gmra.mrb[0].mxu0 %v348
    %v519 = vpop.f32.mrb[0].mxu0
    %v520 = vadd.f32 %v387, %v519
    %v521 = vpop.f32.mrb[0].mxu0
    %v522 = vpop.f32.mrb[0].mxu0
    %v523 = vpop.f32.mrb[0].mxu0
    %524 = vdwg.mxu0
    %v525 = vmax.f32 %v520, 0.0
    %v526 = vpack.c.bf16 %v525, %v525
    %v527 = vld [vmem:[#allocation6] sm:$0xf]
    %v528 = vld [vmem:[#allocation6 + $0x4] sm:$0xf]
    %v529 = vld [vmem:[#allocation6 + $0x8] sm:$0xf]
    %v530 = vld [vmem:[#allocation6 + $0xc] sm:$0xf]
    %v531 = vld [vmem:[#allocation6 + $0x10] sm:$0xf]
    %v532 = vld [vmem:[#allocation6 + $0x14] sm:$0xf]
    %v533 = vld [vmem:[#allocation6 + $0x18] sm:$0xf]
    %v534 = vld [vmem:[#allocation6 + $0x1c] sm:$0xf]
    %v535 = vld [vmem:[#allocation6 + $0x20] sm:$0xf]
    %v536 = vld [vmem:[#allocation6 + $0x24] sm:$0xf]
    %v537 = vld [vmem:[#allocation6 + $0x28] sm:$0xf]
    %v538 = vld [vmem:[#allocation6 + $0x2c] sm:$0xf]
    %v539 = vld [vmem:[#allocation6 + $0x30] sm:$0xf]
    %v540 = vld [vmem:[#allocation6 + $0x34] sm:$0xf]
    %v541 = vld [vmem:[#allocation6 + $0x38] sm:$0xf]
    %v542 = vld [vmem:[#allocation6 + $0x3c] sm:$0xf]
    %v543 = vld [vmem:[#allocation7] sm:$0x1]
    %v545 = vlaneseq
    %v546 = vshrl.u32 %v545, 7
    %v547 = vsub.s32 0, %v546
    %v548 = vrot.slane %v543, %v547
    %v566 = vunpack.c.l.b16 %v527
    %v567 = vunpack.c.l.b16 %v528
    %v568 = vunpack.c.l.b16 %v529
    %v569 = vunpack.c.l.b16 %v530
    %v570 = vunpack.c.l.b16 %v531
    %v571 = vunpack.c.l.b16 %v532
    %v572 = vunpack.c.l.b16 %v533
    %v573 = vunpack.c.l.b16 %v534
    %v574 = vunpack.c.l.b16 %v535
    %v575 = vunpack.c.l.b16 %v536
    %v576 = vunpack.c.l.b16 %v537
    %v577 = vunpack.c.l.b16 %v538
    %v578 = vunpack.c.l.b16 %v539
    %v579 = vunpack.c.l.b16 %v540
    %v580 = vunpack.c.l.b16 %v541
    %v581 = vunpack.c.l.b16 %v542
    %v582 = vpack.c.b16 %v567, %v566
    %v583 = vpack.c.b16 %v569, %v568
    %v584 = vpack.c.b16 %v571, %v570
    %v585 = vpack.c.b16 %v573, %v572
    %v586 = vpack.c.b16 %v575, %v574
    %v587 = vpack.c.b16 %v577, %v576
    %v588 = vpack.c.b16 %v579, %v578
    %v589 = vpack.c.b16 %v581, %v580
    %598 = vmatprep.subr.bf16.mxu0 0
    %599 = vmatpush1.bf16.msra.mxu0 %v582
    %600 = vmatprep.subr.bf16.mxu0 0
    %601 = vmatpush1.bf16.msra.mxu0 %v583
    %602 = vmatprep.subr.bf16.mxu0 0
    %603 = vmatpush1.bf16.msra.mxu0 %v584
    %604 = vmatprep.subr.bf16.mxu0 0
    %605 = vmatpush1.bf16.msra.mxu0 %v585
    %606 = vmatprep.subr.bf16.mxu0 0
    %607 = vmatpush1.bf16.msra.mxu0 %v586
    %608 = vmatprep.subr.bf16.mxu0 0
    %609 = vmatpush1.bf16.msra.mxu0 %v587
    %610 = vmatprep.subr.bf16.mxu0 0
    %611 = vmatpush1.bf16.msra.mxu0 %v588
    %612 = vmatprep.subr.bf16.mxu0 0
    %613 = vmatpush1.bf16.msra.mxu0 %v589
    %614 = vmatprep.subr.bf16.mxu0 0
    %615 = vmatpush1.bf16.msra.mxu0 0
    %616 = vmatprep.subr.bf16.mxu0 0
    %617 = vmatpush1.bf16.msra.mxu0 0
    %618 = vmatprep.subr.bf16.mxu0 0
    %619 = vmatpush1.bf16.msra.mxu0 0
    %620 = vmatprep.subr.bf16.mxu0 0
    %621 = vmatpush1.bf16.msra.mxu0 0
    %622 = vmatprep.subr.bf16.mxu0 0
    %623 = vmatpush1.bf16.msra.mxu0 0
    %624 = vmatprep.subr.bf16.mxu0 0
    %625 = vmatpush1.bf16.msra.mxu0 0
    %626 = vmatprep.subr.bf16.mxu0 0
    %627 = vmatpush1.bf16.msra.mxu0 0
    %628 = vmatprep.subr.bf16.mxu0 0
    %629 = vmatpush1.bf16.msra.mxu0 0
    %630 = vmatprep.mubr.bf16.mxu0 0
    %631 = vmatmul.mubr.bf16.gmra.mrb[0].mxu0 %v526
    %v632 = vpop.f32.mrb[0].mxu0
    %v633 = vadd.f32 %v548, %v632
    %v634 = vpop.f32.mrb[0].mxu0
    %v635 = vpop.f32.mrb[0].mxu0
    %v636 = vpop.f32.mrb[0].mxu0
    %637 = vdwg.mxu0
    %638 = vst [vmem:[%s11] sm:$0xff] %v633
    // Predicated region
    $region62: #{_critic_forward_impl.1} parent=1 // pred_check
      _
    $region63: #{_critic_forward_impl.1} parent=1 // pred_check_branch
      %640 = sbr.rel (0) target = $region65
    $region64: #{_critic_forward_impl.1} parent=1 // pred_region
      _
    $region65: #{_critic_forward_impl.1} parent=1 // pred_fallthru
      _
    // Predicated region
    $region66: #{_critic_forward_impl.1} parent=1 // pred_check
      _
    $region67: #{_critic_forward_impl.1} parent=1 // pred_check_branch
      %642 = sbr.rel (0) target = $region69
    $region68: #{_critic_forward_impl.1} parent=1 // pred_region
      _
    $region69: #{_critic_forward_impl.1} parent=1 // pred_fallthru
      _
    %643 = vsyncpa [#allocation3], 1
    %644 = vsyncpa [#allocation5], 1
    %645 = vsyncpa [#allocation8], 1

</llo_original>
